<compile_context>
chip_gen: v6e
topology: v6e:2x2x1
jax: 0.10.0
libtpu: 0.0.40
codegen_flags: <defaults>
</compile_context>

<pallas_src>
import functools

import jax
import jax.numpy as jnp
from jax.experimental import pallas as pl
from jax.experimental.pallas import tpu as pltpu

_MIB = 1024 * 1024


# ---------------------------------------------------------------------------
# Hardware probing (host-side, trace-time only; defensive so unknown targets
# still get sane conservative defaults).
# ---------------------------------------------------------------------------
def _tpu_hw():
    gen = None
    try:
        kind = jax.devices()[0].device_kind.lower()
        for g in (7, 6, 5, 4):
            if f"v{g}" in kind:
                gen = g
                break
    except Exception:
        pass
    if gen is None:
        gen = 6
    vmem = None
    try:
        info = pltpu.get_tpu_info()
        vmem = getattr(info, "vmem_capacity_bytes", None)
    except Exception:
        vmem = None
    if not vmem:
        vmem = 64 * _MIB if gen >= 7 else 128 * _MIB
    n_tc = 2 if gen >= 7 else 1  # v7x has 2 TensorCores/chip
    return int(vmem), n_tc, gen


def _pick_tile(limit, total, align, min_align=8):
    """Largest tile <= limit dividing `total`, preferring multiples of `align`."""
    t_max = min(limit, total)
    t = (t_max // align) * align
    while t >= align:
        if total % t == 0:
            return t
        t -= align
    t = (t_max // min_align) * min_align
    while t >= min_align:
        if total % t == 0:
            return t
        t -= min_align
    return total  # give up: one block spanning the full dim (still legal)


def _select_config(N, E, V, out_itemsize, mxu_itemsize):
    vmem_cap, n_tc, gen = _tpu_hw()
    small_vmem = vmem_cap <= 80 * _MIB  # v7x-class part (64 MiB / TC)
    # Never request the full physical VMEM: leave headroom for compiler scratch.
    budget = min(int(vmem_cap * 0.8), (52 if small_vmem else 104) * _MIB)

    tm_align = 128 if gen <= 5 else 256      # MXU height: 4x128^2 (v5e) vs 2x256^2
    tm_target = 256 if small_vmem else 512   # larger tm => less weight re-streaming
    # v7x: make sure the "parallel" row axis has >= n_tc steps so both cores work.
    tm_limit = min(tm_target, max(8, N // n_tc))
    tm = _pick_tile(tm_limit, N, tm_align)

    tn_target = 1024 if E >= 4096 else 2048  # keep the streamed (E, tn) tile modest
    tn = _pick_tile(tn_target, V, 128, min_align=128)

    def vmem_bytes(tm_, tn_, out_bufs_, w_bufs_):
        return (out_bufs_ * tm_ * V * out_itemsize   # resident (tm, V) output block
                + w_bufs_ * E * tn_ * mxu_itemsize   # streamed weight tiles
                + 2 * tm_ * E * mxu_itemsize         # x tiles
                + 2 * tn_ * 4                        # bias tiles
                + 2 * tm_ * 4)                       # m / l scratch

    out_bufs, w_bufs = 2, 2
    for _ in range(32):
        if vmem_bytes(tm, tn, out_bufs, w_bufs) <= budget:
            break
        if tn > 1024 and (tn // 2) % 128 == 0 and V % (tn // 2) == 0:
            tn //= 2
        elif out_bufs == 2:
            # The (tm, V) block is written back only once per row tile; single
            # buffering trades one writeback bubble for tm*V*itemsize of VMEM.
            out_bufs = 1
        elif tm > tm_align:
            new_tm = _pick_tile(max(tm // 2, tm_align), N, tm_align)
            if new_tm >= tm:
                break
            tm = new_tm
        elif tn > 128 and (tn // 2) % 128 == 0 and V % (tn // 2) == 0:
            tn //= 2
        else:
            break

    # v5e: least HBM-bandwidth headroom — a 3rd weight buffer absorbs the DMA
    # burst at row-tile boundaries when it fits and there are enough vocab steps.
    if gen == 5 and V // tn >= 3 and vmem_bytes(tm, tn, out_bufs, 3) <= budget:
        w_bufs = 3

    return tm, tn, out_bufs, w_bufs, budget


# ---------------------------------------------------------------------------
# Kernel
# ---------------------------------------------------------------------------
def _generator_kernel(x_ref, w_ref, b_ref, o_ref, m_ref, l_ref, *, tn):
    # x_ref: (tm, E) mxu_dtype | w_ref: (E, tn) mxu_dtype | b_ref: (1, tn) f32
    # o_ref: (tm, V) out_dtype (resident across the vocab grid axis)
    # m_ref / l_ref: (tm, 1) f32 running max / running sum of exp
    j = pl.program_id(1)
    nj = pl.num_programs(1)

    @pl.when(j == 0)
    def _():
        m_ref[...] = jnp.full(m_ref.shape, -jnp.inf, dtype=m_ref.dtype)
        l_ref[...] = jnp.zeros(l_ref.shape, dtype=l_ref.dtype)

    # MXU matmul: bf16 inputs, f32 accumulation. Bias add + softmax math in f32.
    logits = jnp.dot(x_ref[...], w_ref[...], preferred_element_type=jnp.float32)
    logits = logits + b_ref[...].astype(jnp.float32)

    # Online (flash-softmax) running max / logsumexp across vocab tiles.
    m_prev = m_ref[...]
    m_new = jnp.maximum(m_prev, jnp.max(logits, axis=-1, keepdims=True))
    alpha = jnp.exp(m_prev - m_new)
    l_ref[...] = alpha * l_ref[...] + jnp.sum(
        jnp.exp(logits - m_new), axis=-1, keepdims=True
    )
    m_ref[...] = m_new

    # Stash raw logits into the resident output block; normalize once at the end.
    off = j * tn
    if tn % 128 == 0:
        off = pl.multiple_of(off, 128)
    o_ref[:, pl.ds(off, tn)] = logits.astype(o_ref.dtype)

    @pl.when(j == nj - 1)
    def _():
        lse = m_ref[...] + jnp.log(l_ref[...])
        o_ref[...] = (o_ref[...].astype(jnp.float32) - lse).astype(o_ref.dtype)


# ---------------------------------------------------------------------------
# Host wrappers
# ---------------------------------------------------------------------------
@functools.partial(
    jax.jit,
    static_argnames=("tm", "tn", "mxu_dtype", "out_dtype",
                     "out_bufs", "w_bufs", "vmem_limit"),
)
def _generator_call(x, w, b, *, tm, tn, mxu_dtype, out_dtype,
                    out_bufs, w_bufs, vmem_limit):
    B, S, E = x.shape
    V = w.shape[1]
    N = B * S

    x2d = x.reshape(N, E)
    if x2d.dtype != mxu_dtype:
        x2d = x2d.astype(mxu_dtype)
    if w.dtype != mxu_dtype:
        # Fallback only: prefer prepare_generator_params() so the full (E, V)
        # weight is not re-cast (extra ~6*E*V HBM bytes) on every call.
        w = w.astype(mxu_dtype)
    b2d = b.reshape(1, V).astype(jnp.float32)

    grid = (N // tm, V // tn)

    out_spec_kw = {}
    if out_bufs == 1:
        out_spec_kw["pipeline_mode"] = pl.Buffered(1)
    w_spec_kw = {}
    if w_bufs != 2:
        w_spec_kw["pipeline_mode"] = pl.Buffered(w_bufs)

    mxu_isz = jnp.dtype(mxu_dtype).itemsize
    cost = pl.CostEstimate(
        flops=2 * N * E * V,
        transcendentals=N * V,
        bytes_accessed=(
            N * E * mxu_isz                          # activations
            + (N // tm) * E * V * mxu_isz            # weight streamed once per row tile
            + V * 4                                  # bias
            + N * V * jnp.dtype(out_dtype).itemsize  # output writeback
        ),
    )

    kernel = functools.partial(_generator_kernel, tn=tn)
    out2d = pl.pallas_call(
        kernel,
        out_shape=jax.ShapeDtypeStruct((N, V), out_dtype),
        grid_spec=pltpu.PrefetchScalarGridSpec(
            num_scalar_prefetch=0,
            grid=grid,
            in_specs=[
                pl.BlockSpec((tm, E), lambda i, j: (i, 0)),
                pl.BlockSpec((E, tn), lambda i, j: (0, j), **w_spec_kw),
                pl.BlockSpec((1, tn), lambda i, j: (0, j)),
            ],
            out_specs=pl.BlockSpec((tm, V), lambda i, j: (i, 0), **out_spec_kw),
            scratch_shapes=[
                pltpu.VMEM((tm, 1), jnp.float32),  # running max
                pltpu.VMEM((tm, 1), jnp.float32),  # running sum of exp
            ],
        ),
        compiler_params=pltpu.CompilerParams(
            dimension_semantics=("parallel", "arbitrary"),
            vmem_limit_bytes=int(vmem_limit),
        ),
        cost_estimate=cost,
    )(x2d, w, b2d)
    return out2d.reshape(B, S, V)


def prepare_generator_params(w, b, mxu_dtype=jnp.bfloat16):
    """One-time param prep: cast the (E, V) weight to the MXU dtype outside the
    per-call path (avoids a full-weight cast sweep on every forward)."""
    return w.astype(mxu_dtype), b.astype(jnp.float32)


def generator_forward(x, w, b, *, tm=None, tn=None,
                      out_dtype=jnp.bfloat16, mxu_dtype=jnp.bfloat16):
    """Generator.forward: log_softmax(x @ w + b, axis=-1).

    x: (B, S, E); w: (E, V) (PyTorch nn.Linear weight, transposed); b: (V,).
    Returns (B, S, V) log-probabilities in `out_dtype`.
    """
    B, S, E = x.shape
    V = w.shape[1]
    N = B * S

    out_isz = jnp.dtype(out_dtype).itemsize
    mxu_isz = jnp.dtype(mxu_dtype).itemsize
    auto_tm, auto_tn, out_bufs, w_bufs, vmem_limit = _select_config(
        N, E, V, out_isz, mxu_isz)

    if tm is not None:
        tm = min(tm, N)
        out_bufs, w_bufs = 2, 2
    else:
        tm = auto_tm
    tn = min(tn, V) if tn is not None else auto_tn

    assert N % tm == 0, "rows (B*S) must tile evenly by tm (pad upstream if needed)"
    assert V % tn == 0, "vocab must tile evenly by tn (pad upstream if needed)"

    return _generator_call(
        x, w, b, tm=tm, tn=tn, mxu_dtype=mxu_dtype, out_dtype=out_dtype,
        out_bufs=out_bufs, w_bufs=w_bufs, vmem_limit=vmem_limit)


if __name__ == "__main__":
    # Small shapes consistent with the module's forward:
    #   batch = 2, seq = 8, Embedding_Size = 64, vocab_size = 256.
    B, S, E, V = 2, 8, 64, 256

    key = jax.random.PRNGKey(0)
    kx, kw, kb = jax.random.split(key, 3)

    x = jax.random.normal(kx, (B, S, E), dtype=jnp.float32)
    # nn.Linear weight would be (V, E) + (V,); we store the transpose so the
    # kernel does x @ W directly.
    w = jax.random.normal(kw, (E, V), dtype=jnp.float32) * 0.05
    b = jax.random.normal(kb, (V,), dtype=jnp.float32) * 0.05

    ref = jax.nn.log_softmax(jnp.einsum("bse,ev->bsv", x, w) + b, axis=-1)

    # One-time param prep (bf16 weight), then the default auto-tiled bf16 path.
    w_prep, b_prep = prepare_generator_params(w, b)
    out = generator_forward(x, w_prep, b_prep)
    jax.block_until_ready(out)
    assert out.shape == (B, S, V)
    assert out.dtype == jnp.bfloat16
    assert jnp.allclose(out.astype(jnp.float32), ref, atol=6e-2, rtol=0.0)

    # Forced small tiles + f32 output: exercises the multi-row-tile /
    # multi-vocab-tile online log_softmax path (2 row tiles x 2 vocab tiles).
    out_tiled = generator_forward(x, w_prep, b_prep, tm=8, tn=128,
                                  out_dtype=jnp.float32)
    jax.block_until_ready(out_tiled)
    assert jnp.allclose(out_tiled, ref, atol=3e-2, rtol=0.0)

    print("KERNEL_OK")
</pallas_src>

<mosaic_0001>
module attributes {stable_mosaic.version = 11 : i64} {
  func.func @_generator_kernel(%arg0: i32, %arg1: i32, %arg2: memref<16x64xbf16, #tpu.memory_space<vmem>>, %arg3: memref<64x256xbf16, #tpu.memory_space<vmem>>, %arg4: memref<1x256xf32, #tpu.memory_space<vmem>>, %arg5: memref<16x256xbf16, #tpu.memory_space<vmem>>, %arg6: memref<16x1xf32, #tpu.memory_space<vmem>>, %arg7: memref<16x1xf32, #tpu.memory_space<vmem>>) attributes {dimension_semantics = [#tpu.dimension_semantics<parallel>, #tpu.dimension_semantics<arbitrary>], iteration_bounds = array<i64: 1, 1>, scalar_prefetch = 0 : i64, scratch_operands = 2 : i64, tpu.core_type = #tpu.core_type<tc>, window_params = [{transform_indices = @transform_0, window_bounds = array<i64: 16, 64>}, {transform_indices = @transform_1, window_bounds = array<i64: 64, 256>}, {transform_indices = @transform_2, window_bounds = array<i64: 1, 256>}, {transform_indices = @transform_3, window_bounds = array<i64: 16, 256>}]} {
    %c0_i32 = arith.constant 0 : i32
    %0 = arith.cmpi eq, %arg1, %c0_i32 : i32
    %1 = arith.extui %0 : i1 to i32
    %c0_i32_0 = arith.constant 0 : i32
    %2 = arith.cmpi ne, %1, %c0_i32_0 : i32
    scf.if %2 {
      %cst_19 = arith.constant 0xFF800000 : f32
      %33 = vector.broadcast %cst_19 : f32 to vector<16x1xf32>
      %c0_20 = arith.constant 0 : index
      %c0_21 = arith.constant 0 : index
      %34 = vector.load %arg6[%c0_20, %c0_21] : memref<16x1xf32, #tpu.memory_space<vmem>>, vector<16x1xf32>
      tpu.vector_store %arg6[%c0_20, %c0_21], %33 {strides = array<i32>} : memref<16x1xf32, #tpu.memory_space<vmem>>, vector<16x1xf32>,
      %cst_22 = arith.constant 0.000000e+00 : f32
      %35 = vector.broadcast %cst_22 : f32 to vector<16x1xf32>
      %c0_23 = arith.constant 0 : index
      %c0_24 = arith.constant 0 : index
      %36 = vector.load %arg7[%c0_23, %c0_24] : memref<16x1xf32, #tpu.memory_space<vmem>>, vector<16x1xf32>
      tpu.vector_store %arg7[%c0_23, %c0_24], %35 {strides = array<i32>} : memref<16x1xf32, #tpu.memory_space<vmem>>, vector<16x1xf32>,
    } else {
    }
    %c0 = arith.constant 0 : index
    %c0_1 = arith.constant 0 : index
    %3 = vector.load %arg2[%c0, %c0_1] : memref<16x64xbf16, #tpu.memory_space<vmem>>, vector<16x64xbf16>
    %c0_2 = arith.constant 0 : index
    %c0_3 = arith.constant 0 : index
    %4 = vector.load %arg3[%c0_2, %c0_3] : memref<64x256xbf16, #tpu.memory_space<vmem>>, vector<64x256xbf16>
    %cst = arith.constant dense<0.000000e+00> : vector<16x256xf32>
    %5 = tpu.matmul %3, %4, %cst {dimension_numbers = #tpu.dot_dimension_numbers<[1], [0], [0], [1], [0, 0, 1, 1], [], []>} : vector<16x64xbf16>, vector<64x256xbf16>, vector<16x256xf32> -> vector<16x256xf32>
    %c0_4 = arith.constant 0 : index
    %c0_5 = arith.constant 0 : index
    %6 = vector.load %arg4[%c0_4, %c0_5] : memref<1x256xf32, #tpu.memory_space<vmem>>, vector<1x256xf32>
    %7 = vector.broadcast %6 : vector<1x256xf32> to vector<16x256xf32>
    %8 = arith.addf %5, %7 : vector<16x256xf32>
    %c0_6 = arith.constant 0 : index
    %c0_7 = arith.constant 0 : index
    %9 = vector.load %arg6[%c0_6, %c0_7] : memref<16x1xf32, #tpu.memory_space<vmem>>, vector<16x1xf32>
    %cst_8 = arith.constant dense<0xFF800000> : vector<16xf32>
    %10 = vector.multi_reduction <maximumf>, %8, %cst_8 [1] : vector<16x256xf32> to vector<16xf32>
    %11 = vector.shape_cast %10 : vector<16xf32> to vector<16x1xf32>
    %12 = arith.maximumf %9, %11 : vector<16x1xf32>
    %13 = arith.subf %9, %12 : vector<16x1xf32>
    %14 = math.exp %13 : vector<16x1xf32>
    %c0_9 = arith.constant 0 : index
    %c0_10 = arith.constant 0 : index
    %15 = vector.load %arg7[%c0_9, %c0_10] : memref<16x1xf32, #tpu.memory_space<vmem>>, vector<16x1xf32>
    %16 = arith.mulf %14, %15 : vector<16x1xf32>
    %17 = vector.broadcast %12 : vector<16x1xf32> to vector<16x256xf32>
    %18 = arith.subf %8, %17 : vector<16x256xf32>
    %19 = math.exp %18 : vector<16x256xf32>
    %cst_11 = arith.constant dense<0.000000e+00> : vector<16xf32>
    %20 = vector.multi_reduction <add>, %19, %cst_11 [1] : vector<16x256xf32> to vector<16xf32>
    %21 = vector.shape_cast %20 : vector<16xf32> to vector<16x1xf32>
    %22 = arith.addf %16, %21 : vector<16x1xf32>
    %c0_12 = arith.constant 0 : index
    %c0_13 = arith.constant 0 : index
    %23 = vector.load %arg7[%c0_12, %c0_13] : memref<16x1xf32, #tpu.memory_space<vmem>>, vector<16x1xf32>
    tpu.vector_store %arg7[%c0_12, %c0_13], %22 {strides = array<i32>} : memref<16x1xf32, #tpu.memory_space<vmem>>, vector<16x1xf32>,
    %c0_14 = arith.constant 0 : index
    %c0_15 = arith.constant 0 : index
    %24 = vector.load %arg6[%c0_14, %c0_15] : memref<16x1xf32, #tpu.memory_space<vmem>>, vector<16x1xf32>
    tpu.vector_store %arg6[%c0_14, %c0_15], %12 {strides = array<i32>} : memref<16x1xf32, #tpu.memory_space<vmem>>, vector<16x1xf32>,
    %c256_i32 = arith.constant 256 : i32
    %25 = arith.muli %arg1, %c256_i32 : i32
    %26 = tpu.assume_multiple %25, 128 : i32
    %27 = arith.truncf %8 : vector<16x256xf32> to vector<16x256xbf16>
    %c0_16 = arith.constant 0 : index
    %28 = arith.index_cast %26 : i32 to index
    %29 = vector.load %arg5[%c0_16, %28] : memref<16x256xbf16, #tpu.memory_space<vmem>>, vector<16x256xbf16>
    tpu.vector_store %arg5[%c0_16, %28], %27 {strides = array<i32>} : memref<16x256xbf16, #tpu.memory_space<vmem>>, vector<16x256xbf16>,
    %c0_i32_17 = arith.constant 0 : i32
    %30 = arith.cmpi eq, %arg1, %c0_i32_17 : i32
    %31 = arith.extui %30 : i1 to i32
    %c0_i32_18 = arith.constant 0 : i32
    %32 = arith.cmpi ne, %31, %c0_i32_18 : i32
    scf.if %32 {
      %c0_19 = arith.constant 0 : index
      %c0_20 = arith.constant 0 : index
      %33 = vector.load %arg6[%c0_19, %c0_20] : memref<16x1xf32, #tpu.memory_space<vmem>>, vector<16x1xf32>
      %c0_21 = arith.constant 0 : index
      %c0_22 = arith.constant 0 : index
      %34 = vector.load %arg7[%c0_21, %c0_22] : memref<16x1xf32, #tpu.memory_space<vmem>>, vector<16x1xf32>
      %35 = math.log %34 : vector<16x1xf32>
      %36 = arith.addf %33, %35 : vector<16x1xf32>
      %c0_23 = arith.constant 0 : index
      %c0_24 = arith.constant 0 : index
      %37 = vector.load %arg5[%c0_23, %c0_24] : memref<16x256xbf16, #tpu.memory_space<vmem>>, vector<16x256xbf16>
      %38 = arith.extf %37 : vector<16x256xbf16> to vector<16x256xf32>
      %39 = vector.broadcast %36 : vector<16x1xf32> to vector<16x256xf32>
      %40 = arith.subf %38, %39 : vector<16x256xf32>
      %41 = arith.truncf %40 : vector<16x256xf32> to vector<16x256xbf16>
      %c0_25 = arith.constant 0 : index
      %c0_26 = arith.constant 0 : index
      %42 = vector.load %arg5[%c0_25, %c0_26] : memref<16x256xbf16, #tpu.memory_space<vmem>>, vector<16x256xbf16>
      tpu.vector_store %arg5[%c0_25, %c0_26], %41 {strides = array<i32>} : memref<16x256xbf16, #tpu.memory_space<vmem>>, vector<16x256xbf16>,
    } else {
    }
    return
  }
  func.func @transform_0(%arg0: i32, %arg1: i32) -> (i32, i32) {
    %c0_i32 = arith.constant 0 : i32
    %c0_i32_0 = arith.constant 0 : i32
    return %arg0, %c0_i32 : i32, i32
  }
  func.func @transform_1(%arg0: i32, %arg1: i32) -> (i32, i32) {
    %c0_i32 = arith.constant 0 : i32
    %c0_i32_0 = arith.constant 0 : i32
    return %c0_i32, %arg1 : i32, i32
  }
  func.func @transform_2(%arg0: i32, %arg1: i32) -> (i32, i32) {
    %c0_i32 = arith.constant 0 : i32
    %c0_i32_0 = arith.constant 0 : i32
    return %c0_i32, %arg1 : i32, i32
  }
  func.func @transform_3(%arg0: i32, %arg1: i32) -> (i32, i32) {
    %c0_i32 = arith.constant 0 : i32
    %c0_i32_0 = arith.constant 0 : i32
    return %arg0, %c0_i32 : i32, i32
  }
}

</mosaic_0001>

<llo_original>
// kernel: _generator_call.1
$region0: #{_generator_call.1}
  #allocation0 [shape = 'u32[]', space=smem, size = 0x4, offset = 0x4, fixed_abs, tag = 'smem constant byte address 0x4 - core index']
  #allocation1 [shape = 'u32[144,128]{1,0:T(1,128)}', space=vmem, size = 0x12000, scoped, tag = 'internal scratch']
  #allocation2 [shape = 'f32[16,1]{1,0:T(8,128)}', space=vmem, size = 0x2000, scoped, tag = 'scratch operand']
  #allocation3 [shape = 'f32[16,1]{1,0:T(8,128)}', space=vmem, size = 0x2000, scoped, tag = 'scratch operand']
  %s0 = inlined_call_operand.vmem [shape: bf16[16,64], index: 0, kind: input, shape index: {}]
  %s1 = inlined_call_operand.hbm [shape: bf16[64,256], index: 1, kind: input, shape index: {}]
  %s2 = inlined_call_operand.vmem [shape: f32[1,256], index: 2, kind: input, shape index: {}]
  %s3 = inlined_call_operand.hbm [shape: bf16[16,256], index: 3, kind: output, shape index: {}]
  %s4 = sld [smem:[#allocation0]]
  $region34: #{_generator_call.1} parent=0
    _
  %s6 = ssub.s32 1, %s4
  %s7 = scalar_select 0, %s6, %s4
  $region1: #{_generator_call.1} parent=0
    #allocation4 [shape = 'u8[32768]{0}', space=vmem, size = 0x8000, scoped, tag = 'input window, operand 1, single buffered']
    #allocation5 [shape = 's32[1]{0}', space=sflag, size = 0x4, scoped, tag = 'scoped memory for _generator_call.1']
    #allocation6 [shape = 's32[1]{0}', space=sflag, size = 0x4, scoped, tag = 'scoped memory for _generator_call.1']
    #allocation7 [shape = 'u8[8192]{0}', space=vmem, size = 0x2000, scoped, tag = 'output window, operand 0, single buffered']
    %8 = vsyncpa [#allocation5], 0
    %9 = vsyncpa [#allocation6], 0
    // Predicated region
    $region2: #{_generator_call.1} parent=1 // pred_check
      _
    $region3: #{_generator_call.1} parent=1 // pred_check_branch
      %11 = sbr.rel (0) target = $region5
    $region4: #{_generator_call.1} parent=1 // pred_region
      _
    $region5: #{_generator_call.1} parent=1 // pred_fallthru
      _
    // Predicated region
    $region6: #{_generator_call.1} parent=1 // pred_check
      _
    $region7: #{_generator_call.1} parent=1 // pred_check_branch
      %13 = sbr.rel (0) target = $region9
    $region8: #{_generator_call.1} parent=1 // pred_region
      %s15 = ssub.s32 1024, 1024
      %16 = vsyncadd [#allocation5], %s15
      %s17 = sshll.u32 [#allocation4], 4
      %s18 = int_to_ptr.vmem [resolvable:$true] %s17
      %23 = dma.hbm_to_vmem [thread:$0]  %s1, 1024, %s18, [#allocation5], 128, 128, 8
    $region9: #{_generator_call.1} parent=1 // pred_fallthru
      _
    // Predicated region
    $region10: #{_generator_call.1} parent=1 // pred_check
      _
    $region11: #{_generator_call.1} parent=1 // pred_check_branch
      %25 = sbr.rel (0) target = $region13
    $region12: #{_generator_call.1} parent=1 // pred_region
      _
    $region13: #{_generator_call.1} parent=1 // pred_fallthru
      _
    // Predicated region
    $region14: #{_generator_call.1} parent=1 // pred_check
      _
    $region15: #{_generator_call.1} parent=1 // pred_check_branch
      %27 = sbr.rel (0) target = $region17
    $region16: #{_generator_call.1} parent=1 // pred_region
      %28 = dma.done [#allocation5], 1024
    $region17: #{_generator_call.1} parent=1 // pred_fallthru
      _
    %p30 = scmp.eq.s32.totalorder 0, 0
    // Predicated region
    $region18: #{_generator_call.1} parent=1 // pred_check
      %p31 = pneg %p30
    $region19: #{_generator_call.1} parent=1 // pred_check_branch
      %33 = sbr.rel (%p31) target = $region21
    $region20: #{_generator_call.1} parent=1 // pred_region
      %vm34 = vcmask 7168
      %35 = vst.msk [vmem:[#allocation2] sm:$0xff] %vm34, -inf
      %36 = vst.msk [vmem:[#allocation2 + $0x8] sm:$0xff] %vm34, -inf
      %37 = vst.msk [vmem:[#allocation3] sm:$0xff] %vm34, 0.0
      %38 = vst.msk [vmem:[#allocation3 + $0x8] sm:$0xff] %vm34, 0.0
    $region21: #{_generator_call.1} parent=1 // pred_fallthru
      _
    %v39 = vld [vmem:[%s0] sm:$0xf]
    %v40 = vld [vmem:[%s0 + $0x4] sm:$0xf]
    %v41 = vld [vmem:[#allocation4] sm:$0xff]
    %v42 = vld [vmem:[#allocation4 + $0x8] sm:$0xff]
    %v43 = vld [vmem:[#allocation4 + $0x10] sm:$0xff]
    %v44 = vld [vmem:[#allocation4 + $0x18] sm:$0xff]
    %v45 = vld [vmem:[#allocation4 + $0x20] sm:$0xff]
    %v46 = vld [vmem:[#allocation4 + $0x28] sm:$0xff]
    %v47 = vld [vmem:[#allocation4 + $0x30] sm:$0xff]
    %v48 = vld [vmem:[#allocation4 + $0x38] sm:$0xff]
    %v49 = vld [vmem:[%s2] sm:$0x3]
    %v51 = vlaneseq
    %v52 = vshrl.u32 %v51, 7
    %v53 = vsub.s32 0, %v52
    %v54 = vrot.slane %v49, %v53
    %v55 = vlaneseq
    %v56 = vshrl.u32 %v55, 7
    %v57 = vsub.s32 1, %v56
    %v58 = vrot.slane %v49, %v57
    %v63 = vunpack.c.l.b16 %v39
    %v64 = vunpack.c.l.b16 %v40
    %v65 = vpack.c.b16 %v64, %v63
    %v74 = vunpack.c.l.b16 %v41
    %v75 = vunpack.c.h.b16 %v41
    %v76 = vunpack.c.l.b16 %v42
    %v77 = vunpack.c.h.b16 %v42
    %v78 = vunpack.c.l.b16 %v43
    %v79 = vunpack.c.h.b16 %v43
    %v80 = vunpack.c.l.b16 %v44
    %v81 = vunpack.c.h.b16 %v44
    %v82 = vunpack.c.l.b16 %v45
    %v83 = vunpack.c.h.b16 %v45
    %v84 = vunpack.c.l.b16 %v46
    %v85 = vunpack.c.h.b16 %v46
    %v86 = vunpack.c.l.b16 %v47
    %v87 = vunpack.c.h.b16 %v47
    %v88 = vunpack.c.l.b16 %v48
    %v89 = vunpack.c.h.b16 %v48
    %v90 = vpack.c.b16 %v76, %v74
    %v91 = vpack.c.b16 %v77, %v75
    %v92 = vpack.c.b16 %v80, %v78
    %v93 = vpack.c.b16 %v81, %v79
    %v94 = vpack.c.b16 %v84, %v82
    %v95 = vpack.c.b16 %v85, %v83
    %v96 = vpack.c.b16 %v88, %v86
    %v97 = vpack.c.b16 %v89, %v87
    %vm106 = vcmask 523264
    %v108 = vsel %vm106, %v65, 0
    %110 = vmatprep.subr.bf16.mxu0 0
    %111 = vmatpush1.bf16.msra.mxu0 0
    %112 = vmatprep.subr.bf16.mxu0 0
    %113 = vmatpush1.bf16.msra.mxu0 0
    %114 = vmatprep.subr.bf16.mxu0 0
    %115 = vmatpush1.bf16.msra.mxu0 0
    %116 = vmatprep.subr.bf16.mxu0 0
    %117 = vmatpush1.bf16.msra.mxu0 0
    %118 = vmatprep.subr.bf16.mxu0 %v97
    %119 = vmatpush1.bf16.msra.mxu0 %v96
    %120 = vmatprep.subr.bf16.mxu0 %v95
    %121 = vmatpush1.bf16.msra.mxu0 %v94
    %122 = vmatprep.subr.bf16.mxu0 %v93
    %123 = vmatpush1.bf16.msra.mxu0 %v92
    %124 = vmatprep.subr.bf16.mxu0 %v91
    %125 = vmatpush1.bf16.msra.mxu0 %v90
    %126 = vmatprep.subr.bf16.mxu0 0
    %127 = vmatpush2.bf16.msra.mxu0 0
    %128 = vmatprep.subr.bf16.mxu0 0
    %129 = vmatpush2.bf16.msra.mxu0 0
    %130 = vmatprep.subr.bf16.mxu0 0
    %131 = vmatpush2.bf16.msra.mxu0 0
    %132 = vmatprep.subr.bf16.mxu0 0
    %133 = vmatpush2.bf16.msra.mxu0 0
    %134 = vmatprep.subr.bf16.mxu0 0
    %135 = vmatpush2.bf16.msra.mxu0 0
    %136 = vmatprep.subr.bf16.mxu0 0
    %137 = vmatpush2.bf16.msra.mxu0 0
    %138 = vmatprep.subr.bf16.mxu0 0
    %139 = vmatpush2.bf16.msra.mxu0 0
    %140 = vmatprep.subr.bf16.mxu0 0
    %141 = vmatpush2.bf16.msra.mxu0 0
    %142 = vmatprep.mubr.bf16.mxu0 0
    %143 = vmatmul.mubr.bf16.gmra.mxu0 %v108
    %v144 = vpop.f32.mrf.mxu0
    %v145 = vadd.f32 %v54, %v144
    %v146 = vpop.f32.mrf.mxu0
    %v147 = vadd.f32 %v58, %v146
    %v148 = vpop.f32.mrf.mxu0
    %v149 = vadd.f32 %v54, %v148
    %v150 = vpop.f32.mrf.mxu0
    %v151 = vadd.f32 %v58, %v150
    %152 = vdwg.mxu0
    %v153 = vld [vmem:[#allocation2] sm:$0xff]
    %v154 = vld [vmem:[#allocation2 + $0x8] sm:$0xff]
    %v155 = vmax.f32 %v145, %v147
    %156 = vmax.xlane.f32.xlu0 %v155
    %v157 = vpop.xlane.xlu0 %156
    %v158 = vmax.f32 %v149, %v151
    %159 = vmax.xlane.f32.xlu0 %v158
    %v160 = vpop.xlane.xlu0 %159
    %v161 = vmax.f32 %v153, %v157
    %v162 = vmax.f32 %v154, %v160
    %v163 = vsub.f32 %v153, %v161
    %v164 = vsub.f32 %v154, %v162
    %v165 = vmul.f32 %v163, 1.442695
    %v166 = vpow.pop %v165
    %v167 = vmul.f32 %v164, 1.442695
    %v168 = vpow.pop %v167
    %v169 = vld [vmem:[#allocation3] sm:$0xff]
    %v170 = vld [vmem:[#allocation3 + $0x8] sm:$0xff]
    %v171 = vmul.f32 %v166, %v169
    %v172 = vmul.f32 %v168, %v170
    %174 = vset.pattern.permute.xlu0 0
    %175 = vperm.xlu0 %174, %v161
    %v176 = vpop.permute.xlu0 %175
    %179 = vset.pattern.permute.xlu0 0
    %180 = vperm.xlu0 %179, %v162
    %v181 = vpop.permute.xlu0 %180
    %v183 = vsub.f32 %v145, %v176
    %v184 = vsub.f32 %v147, %v176
    %v185 = vsub.f32 %v149, %v181
    %v186 = vsub.f32 %v151, %v181
    %v187 = vmul.f32 %v183, 1.442695
    %v188 = vpow.pop %v187
    %v189 = vmul.f32 %v184, 1.442695
    %v190 = vpow.pop %v189
    %v191 = vmul.f32 %v185, 1.442695
    %v192 = vpow.pop %v191
    %v193 = vmul.f32 %v186, 1.442695
    %v194 = vpow.pop %v193
    %v195 = vadd.f32 %v188, %v190
    %196 = vadd.xlane.f32.xlu0 %v195
    %v197 = vpop.xlane.xlu0 %196
    %v198 = vadd.f32 %v192, %v194
    %199 = vadd.xlane.f32.xlu0 %v198
    %v200 = vpop.xlane.xlu0 %199
    %v201 = vadd.f32 %v171, %v197
    %v202 = vadd.f32 %v172, %v200
    %vm203 = vcmask 7168
    %204 = vst.msk [vmem:[#allocation3] sm:$0xff] %vm203, %v201
    %205 = vst.msk [vmem:[#allocation3 + $0x8] sm:$0xff] %vm203, %v202
    %206 = vst.msk [vmem:[#allocation2] sm:$0xff] %vm203, %v161
    %207 = vst.msk [vmem:[#allocation2 + $0x8] sm:$0xff] %vm203, %v162
    %s208 = smul.u32 0, 256
    %v209 = vpack.c.bf16 %v149, %v145
    %v210 = vpack.c.bf16 %v151, %v147
    %v213 = vunpack.c.l.b16 %v209
    %v214 = vunpack.c.l.b16 %v210
    %v215 = vunpack.c.h.b16 %v209
    %v216 = vunpack.c.h.b16 %v210
    %v217 = vpack.c.b16 %v214, %v213
    %v218 = vpack.c.b16 %v216, %v215
    %s221 = sshra.s32 %s208, 7
    %s222 = sand.u32 %s208, 127
    %s223 = smul.addr %s221, 4
    %s224 = scalar_lea.vmem [#allocation7], %s223
    %225 = vst [vmem:[%s224] sm:$0xff] %v217
    %226 = vst [vmem:[%s224 + $0x8] sm:$0xff] %v218
    // Predicated region
    $region22: #{_generator_call.1} parent=1 // pred_check
      %p227 = pneg %p30
    $region23: #{_generator_call.1} parent=1 // pred_check_branch
      %229 = sbr.rel (%p227) target = $region25
    $region24: #{_generator_call.1} parent=1 // pred_region
      %v230 = vld [vmem:[#allocation2] sm:$0xff]
      %v231 = vld [vmem:[#allocation2 + $0x8] sm:$0xff]
      %v232 = vld [vmem:[#allocation3] sm:$0xff]
      %v233 = vld [vmem:[#allocation3 + $0x8] sm:$0xff]
      %v234 = vlog2.pop %v232
      %v235 = vmul.f32 %v234, 0.6931472
      %v236 = vlog2.pop %v233
      %v237 = vmul.f32 %v236, 0.6931472
      %v238 = vadd.f32 %v230, %v235
      %v239 = vadd.f32 %v231, %v237
      %v240 = vld [vmem:[#allocation7] sm:$0xff]
      %v241 = vld [vmem:[#allocation7 + $0x8] sm:$0xff]
      %v242 = vunpack.c.l.bf16 %v240
      %v243 = vunpack.c.h.bf16 %v240
      %v244 = vunpack.c.l.bf16 %v241
      %v245 = vunpack.c.h.bf16 %v241
      %247 = vset.pattern.permute.xlu0 0
      %248 = vperm.xlu0 %247, %v238
      %v249 = vpop.permute.xlu0 %248
      %252 = vset.pattern.permute.xlu0 0
      %253 = vperm.xlu0 %252, %v239
      %v254 = vpop.permute.xlu0 %253
      %v256 = vsub.f32 %v242, %v249
      %v257 = vsub.f32 %v243, %v249
      %v258 = vsub.f32 %v244, %v254
      %v259 = vsub.f32 %v245, %v254
      %v260 = vpack.c.bf16 %v258, %v256
      %v261 = vpack.c.bf16 %v259, %v257
      %v264 = vunpack.c.l.b16 %v260
      %v265 = vunpack.c.l.b16 %v261
      %v266 = vunpack.c.h.b16 %v260
      %v267 = vunpack.c.h.b16 %v261
      %v268 = vpack.c.b16 %v265, %v264
      %v269 = vpack.c.b16 %v267, %v266
      %272 = vst [vmem:[#allocation7] sm:$0xff] %v268
      %273 = vst [vmem:[#allocation7 + $0x8] sm:$0xff] %v269
    $region25: #{_generator_call.1} parent=1 // pred_fallthru
      _
    // Predicated region
    $region26: #{_generator_call.1} parent=1 // pred_check
      _
    $region27: #{_generator_call.1} parent=1 // pred_check_branch
      %275 = sbr.rel (0) target = $region29
    $region28: #{_generator_call.1} parent=1 // pred_region
      %s277 = ssub.s32 256, 256
      %278 = vsyncadd [#allocation6], %s277
      %s279 = sshll.u32 [#allocation7], 4
      %s280 = int_to_ptr.vmem [resolvable:$true] %s279
      %285 = dma.vmem_to_hbm [thread:$0]  %s280, 256, %s3, [#allocation6], 128, 128, 8
    $region29: #{_generator_call.1} parent=1 // pred_fallthru
      _
    // Predicated region
    $region30: #{_generator_call.1} parent=1 // pred_check
      _
    $region31: #{_generator_call.1} parent=1 // pred_check_branch
      %287 = sbr.rel (0) target = $region33
    $region32: #{_generator_call.1} parent=1 // pred_region
      %288 = dma.done [#allocation6], 256
    $region33: #{_generator_call.1} parent=1 // pred_fallthru
      _
    %289 = vsyncpa [#allocation5], 1
    %290 = vsyncpa [#allocation6], 1

</llo_original>
